<compile_context>
chip_gen: v5e
topology: v5e:2x2
jax: 0.10.0
libtpu: 0.0.40
codegen_flags: <defaults>
</compile_context>

<pallas_src>
import functools

import jax
import jax.numpy as jnp
from jax.experimental import pallas as pl
from jax.experimental.pallas import tpu as pltpu


def _round_up(x, m):
    return (x + m - 1) // m * m


def _attn_kernel(src_ref, embt_ref, out_ref):
    # src_ref : (tm, D)  f32 tile of flattened (N*L, M) inputs (first D features)
    # embt_ref: (D, tn)  bf16 pre-transposed candidate embeddings (VMEM-resident)
    # out_ref : (tm, tn) f32 sigmoid(src @ E^T) tile
    s = src_ref[...].astype(embt_ref.dtype)            # in-kernel bf16 cast, hidden under DMA
    attn = jnp.dot(s, embt_ref[...], preferred_element_type=jnp.float32)
    # sigmoid(x) = 0.5*tanh(0.5*x) + 0.5 : a single EUP op per element
    out_ref[...] = (0.5 * jnp.tanh(0.5 * attn) + 0.5).astype(out_ref.dtype)


@functools.partial(jax.jit, static_argnums=(2,))
def attn_forward(src, emb_loc_table, loc_max):
    """JAX/Pallas equivalent of Attn.forward(src, ds).

    src:            (N, L, M) float32
    emb_loc_table:  (num_embeddings, D) float32 embedding weights (row 0 unused)
    loc_max:        int, number of candidate locations (ids 1..loc_max)
    """
    N, L, M = src.shape
    D = min(512, M)                          # torch.split(src, 512, -1)[0]

    num_emb, emb_dim = emb_loc_table.shape
    # PyTorch would raise on a shape mismatch — do the same instead of truncating.
    assert emb_dim == D, (
        f"src feature dim (after split) {D} must equal embedding dim {emb_dim}")
    assert loc_max + 1 <= num_emb, (
        f"embedding table has {num_emb} rows, needs at least loc_max+1={loc_max + 1}")

    # Candidate embeddings for ids 1..loc_max, transposed once and cast to bf16.
    # Tiny compared to src/out; reused by every row tile.
    emb_t = jax.lax.slice_in_dim(emb_loc_table, 1, loc_max + 1, axis=0).T  # (D, loc_max)
    emb_t = emb_t.astype(jnp.bfloat16)

    rows = N * L
    x = src.reshape(rows, M)                 # free: last dim untouched, no copy

    # ---- tile selection (conservative budget that fits v5e / v6e / v7x) ----
    # Candidate tile: whole loc_max when it fits -> E^T block index is constant
    # across the grid, so it is DMA'd from HBM once and stays VMEM-resident.
    tn = loc_max if loc_max <= 2048 else 2048            # 2048 % 128 == 0

    def _vmem_bytes(tm_):
        return (tm_ * D * 4 * 2            # src tile, f32, double-buffered
                + tm_ * tn * 4 * 2         # out tile, f32, double-buffered
                + D * tn * 2 * 2)          # E^T tile, bf16, double-buffered

    VMEM_BUDGET = 24 * 1024 * 1024         # leaves headroom on v7x's 64 MiB physical VMEM
    tm = 1024
    while tm > 16 and _vmem_bytes(tm) > VMEM_BUDGET:
        tm //= 2
    tm = min(tm, max(16, _round_up(rows, 16)))           # 16: bf16 (16,128) sublane packing

    # v7x megacore: guarantee >= 2 tiles on the "parallel" row axis when possible.
    if rows >= 32 and pl.cdiv(rows, tm) < 2:
        tm = max(16, _round_up(pl.cdiv(rows, 2), 16))

    grid = (pl.cdiv(rows, tm), pl.cdiv(loc_max, tn))

    # Accurate advisory cost: src read once, E^T read once (resident) or once per
    # row tile (tiled candidates), output written once.
    e_reads = 1 if grid[1] == 1 else grid[0]
    cost = pl.CostEstimate(
        flops=2 * rows * D * loc_max,
        transcendentals=rows * loc_max,
        bytes_accessed=(rows * D * 4
                        + e_reads * D * loc_max * 2
                        + rows * loc_max * 4))

    out = pl.pallas_call(
        _attn_kernel,
        out_shape=jax.ShapeDtypeStruct((rows, loc_max), jnp.float32),
        grid_spec=pltpu.PrefetchScalarGridSpec(
            num_scalar_prefetch=0,
            grid=grid,
            in_specs=[
                # Reads only the first D columns of the (rows, M) input; no wrapper copy.
                pl.BlockSpec((tm, D), lambda i, j: (i, 0)),
                pl.BlockSpec((D, tn), lambda i, j: (0, j)),
            ],
            out_specs=pl.BlockSpec((tm, tn), lambda i, j: (i, j)),
        ),
        compiler_params=pltpu.CompilerParams(
            dimension_semantics=("parallel", "arbitrary"),
            vmem_limit_bytes=32 * 1024 * 1024,   # >= budget, within scoped limits everywhere
        ),
        cost_estimate=cost,
    )(x, emb_t)

    return out.reshape(N, L, loc_max)        # free: last dim untouched


def reference_forward(src, emb_loc_table, loc_max, dtype=jnp.float32):
    """Pure-JAX reference mirroring the PyTorch forward (optionally bf16 operands)."""
    src = src[..., :512].astype(dtype)
    emb = emb_loc_table[1: loc_max + 1].astype(dtype)
    attn = jnp.einsum("nlm,cm->nlc", src, emb, preferred_element_type=jnp.float32)
    return jax.nn.sigmoid(attn)


if __name__ == "__main__":
    # Small, deterministic shapes consistent with the module's forward:
    N, L, D = 2, 8, 32          # src: (N, L, M) with M == embedding dim D
    loc_max = 16
    quadkey_max = 16

    key = jax.random.PRNGKey(0)
    k_src, k_emb_loc, k_emb_qk, k_val = jax.random.split(key, 4)

    src = jax.random.normal(k_src, (N, L, D), dtype=jnp.float32)
    ds = None  # `ds` is unused by forward()

    # Deterministic parameter init (synthetic, not a checkpoint load).
    emb_loc_table = 0.02 * jax.random.normal(k_emb_loc, (loc_max + 1, D), dtype=jnp.float32)
    emb_quadkey_table = 0.02 * jax.random.normal(k_emb_qk, (quadkey_max + 1, D), dtype=jnp.float32)  # unused in forward
    value_weight = 0.02 * jax.random.normal(k_val, (1, 100), dtype=jnp.float32)                       # unused in forward

    out = attn_forward(src, emb_loc_table, loc_max)
    out = jax.block_until_ready(out)
    assert out.shape == (N, L, loc_max)

    # Check against a reference with the same bf16 operands / f32 accumulation.
    ref_bf16 = reference_forward(src, emb_loc_table, loc_max, dtype=jnp.bfloat16)
    assert jnp.allclose(out, ref_bf16, atol=1e-3, rtol=1e-3), "mismatch vs bf16 reference"

    # Sanity check against the full-f32 reference (bf16 operand rounding only).
    ref_f32 = reference_forward(src, emb_loc_table, loc_max, dtype=jnp.float32)
    assert jnp.allclose(out, ref_f32, atol=2e-2, rtol=2e-2), "mismatch vs f32 reference"

    print("KERNEL_OK")
</pallas_src>

<mosaic_0001>
module attributes {stable_mosaic.version = 11 : i64} {
  func.func @_attn_kernel(%arg0: i32, %arg1: i32, %arg2: memref<16x32xf32, #tpu.memory_space<vmem>>, %arg3: memref<32x16xbf16, #tpu.memory_space<vmem>>, %arg4: memref<16x16xf32, #tpu.memory_space<vmem>>) attributes {dimension_semantics = [#tpu.dimension_semantics<parallel>, #tpu.dimension_semantics<arbitrary>], iteration_bounds = array<i64: 1, 1>, scalar_prefetch = 0 : i64, scratch_operands = 0 : i64, tpu.core_type = #tpu.core_type<tc>, window_params = [{transform_indices = @transform_0, window_bounds = array<i64: 16, 32>}, {transform_indices = @transform_1, window_bounds = array<i64: 32, 16>}, {transform_indices = @transform_2, window_bounds = array<i64: 16, 16>}]} {
    %c0 = arith.constant 0 : index
    %c0_0 = arith.constant 0 : index
    %0 = vector.load %arg2[%c0, %c0_0] : memref<16x32xf32, #tpu.memory_space<vmem>>, vector<16x32xf32>
    %1 = arith.truncf %0 : vector<16x32xf32> to vector<16x32xbf16>
    %c0_1 = arith.constant 0 : index
    %c0_2 = arith.constant 0 : index
    %2 = vector.load %arg3[%c0_1, %c0_2] : memref<32x16xbf16, #tpu.memory_space<vmem>>, vector<32x16xbf16>
    %cst = arith.constant dense<0.000000e+00> : vector<16x16xf32>
    %3 = tpu.matmul %1, %2, %cst {dimension_numbers = #tpu.dot_dimension_numbers<[1], [0], [0], [1], [0, 0, 1, 1], [], []>} : vector<16x32xbf16>, vector<32x16xbf16>, vector<16x16xf32> -> vector<16x16xf32>
    %cst_3 = arith.constant 5.000000e-01 : f32
    %4 = vector.broadcast %cst_3 : f32 to vector<16x16xf32>
    %5 = arith.mulf %4, %3 : vector<16x16xf32>
    %6 = math.tanh %5 : vector<16x16xf32>
    %cst_4 = arith.constant 5.000000e-01 : f32
    %7 = vector.broadcast %cst_4 : f32 to vector<16x16xf32>
    %8 = arith.mulf %7, %6 : vector<16x16xf32>
    %cst_5 = arith.constant 5.000000e-01 : f32
    %9 = vector.broadcast %cst_5 : f32 to vector<16x16xf32>
    %10 = arith.addf %8, %9 : vector<16x16xf32>
    %c0_6 = arith.constant 0 : index
    %c0_7 = arith.constant 0 : index
    %11 = vector.load %arg4[%c0_6, %c0_7] : memref<16x16xf32, #tpu.memory_space<vmem>>, vector<16x16xf32>
    tpu.vector_store %arg4[%c0_6, %c0_7], %10 {strides = array<i32>} : memref<16x16xf32, #tpu.memory_space<vmem>>, vector<16x16xf32>,
    return
  }
  func.func @transform_0(%arg0: i32, %arg1: i32) -> (i32, i32) {
    %c0_i32 = arith.constant 0 : i32
    %c0_i32_0 = arith.constant 0 : i32
    return %arg0, %c0_i32 : i32, i32
  }
  func.func @transform_1(%arg0: i32, %arg1: i32) -> (i32, i32) {
    %c0_i32 = arith.constant 0 : i32
    %c0_i32_0 = arith.constant 0 : i32
    return %c0_i32, %arg1 : i32, i32
  }
  func.func @transform_2(%arg0: i32, %arg1: i32) -> (i32, i32) {
    %c0_i32 = arith.constant 0 : i32
    return %arg0, %arg1 : i32, i32
  }
}

</mosaic_0001>

<llo_original>
// kernel: attn_forward.1
$region0: #{attn_forward.1}
  #allocation0 [shape = 'u32[]', space=smem, size = 0x4, offset = 0x4, fixed_abs, tag = 'smem constant byte address 0x4 - core index']
  #allocation1 [shape = 'u32[72,128]{1,0:T(1,128)}', space=vmem, size = 0x9000, scoped, tag = 'internal scratch']
  %s0 = inlined_call_operand.vmem [shape: f32[16,32], index: 0, kind: input, shape index: {}]
  %s1 = inlined_call_operand.vmem [shape: bf16[32,16], index: 1, kind: input, shape index: {}]
  %s2 = inlined_call_operand.hbm [shape: f32[16,16], index: 2, kind: output, shape index: {}]
  %s3 = sld [smem:[#allocation0]]
  $region18: #{attn_forward.1} parent=0
    _
  %s5 = ssub.s32 1, %s3
  %s6 = scalar_select 0, %s5, %s3
  $region1: #{attn_forward.1} parent=0
    #allocation2 [shape = 'u8[8192]{0}', space=vmem, size = 0x2000, scoped, tag = 'output window, operand 0, single buffered']
    #allocation3 [shape = 's32[1]{0}', space=sflag, size = 0x4, scoped, tag = 'scoped memory for attn_forward.1']
    %7 = vsyncpa [#allocation3], 0
    // Predicated region
    $region2: #{attn_forward.1} parent=1 // pred_check
      _
    $region3: #{attn_forward.1} parent=1 // pred_check_branch
      %9 = sbr.rel (0) target = $region5
    $region4: #{attn_forward.1} parent=1 // pred_region
      _
    $region5: #{attn_forward.1} parent=1 // pred_fallthru
      _
    // Predicated region
    $region6: #{attn_forward.1} parent=1 // pred_check
      _
    $region7: #{attn_forward.1} parent=1 // pred_check_branch
      %11 = sbr.rel (0) target = $region9
    $region8: #{attn_forward.1} parent=1 // pred_region
      _
    $region9: #{attn_forward.1} parent=1 // pred_fallthru
      _
    %v13 = vld [vmem:[%s0] sm:$0xff]
    %v14 = vld [vmem:[%s0 + $0x8] sm:$0xff]
    %v15 = vpack.c.bf16 %v14, %v13
    %v16 = vld [vmem:[%s1] sm:$0xf]
    %v17 = vld [vmem:[%s1 + $0x4] sm:$0xf]
    %v18 = vld [vmem:[%s1 + $0x8] sm:$0xf]
    %v19 = vld [vmem:[%s1 + $0xc] sm:$0xf]
    %v24 = vunpack.c.l.b16 %v16
    %v25 = vunpack.c.l.b16 %v17
    %v26 = vunpack.c.l.b16 %v18
    %v27 = vunpack.c.l.b16 %v19
    %v28 = vpack.c.b16 %v25, %v24
    %v29 = vpack.c.b16 %v27, %v26
    %vm32 = vcmask 261120
    %v34 = vsel %vm32, %v15, 0
    %36 = vmatpush.bf16.msra.mxu0 0
    %37 = vmatpush.bf16.msra.mxu0 0
    %38 = vmatpush.bf16.msra.mxu0 0
    %39 = vmatpush.bf16.msra.mxu0 0
    %40 = vmatpush.bf16.msra.mxu0 0
    %41 = vmatpush.bf16.msra.mxu0 0
    %42 = vmatpush.bf16.msra.mxu0 %v29
    %43 = vmatpush.bf16.msra.mxu0 %v28
    %44 = vmatmul.bf16.gmra.mxu0 %v34
    %v45 = vpop.f32.mrf.mxu0
    %v46 = vadd.f32 0.0, %v45
    %v47 = vpop.f32.mrf.mxu0
    %v48 = vadd.f32 0.0, %v47
    %49 = vdwg.mxu0
    %v50 = vmul.f32 %v46, 0.5
    %v51 = vmul.f32 %v48, 0.5
    %v52 = vtanh.pop %v50
    %v53 = vtanh.pop %v51
    %v54 = vmul.f32 %v52, 0.5
    %v55 = vmul.f32 %v53, 0.5
    %v56 = vadd.f32 %v54, 0.5
    %v57 = vadd.f32 %v55, 0.5
    %vm58 = vcmask 130048
    %59 = vst.msk [vmem:[#allocation2] sm:$0xff] %vm58, %v56
    %60 = vst.msk [vmem:[#allocation2 + $0x8] sm:$0xff] %vm58, %v57
    // Predicated region
    $region10: #{attn_forward.1} parent=1 // pred_check
      _
    $region11: #{attn_forward.1} parent=1 // pred_check_branch
      %62 = sbr.rel (0) target = $region13
    $region12: #{attn_forward.1} parent=1 // pred_region
      %64 = vsyncadd [#allocation3], 0
      %s65 = sshll.u32 [#allocation2], 4
      %s66 = int_to_ptr.vmem [resolvable:$true] %s65
      %s67 = sshll.u32 %s2, 4
      %s68 = int_to_ptr.hbm [resolvable:$true] %s67
      %73 = dma.vmem_to_hbm [thread:$0]  %s66, 256, %s68, [#allocation3], 128, 128, 8
    $region13: #{attn_forward.1} parent=1 // pred_fallthru
      _
    // Predicated region
    $region14: #{attn_forward.1} parent=1 // pred_check
      _
    $region15: #{attn_forward.1} parent=1 // pred_check_branch
      %75 = sbr.rel (0) target = $region17
    $region16: #{attn_forward.1} parent=1 // pred_region
      %77 = dma.done [#allocation3], 256
    $region17: #{attn_forward.1} parent=1 // pred_fallthru
      _
    %78 = vsyncpa [#allocation3], 1

</llo_original>
